<compile_context>
chip_gen: v7x
topology: tpu7x:2x2x1
jax: 0.10.0
libtpu: 0.0.40
codegen_flags: <defaults>
</compile_context>

<pallas_src>
import functools

import jax
import jax.numpy as jnp
from jax.experimental import pallas as pl
from jax.experimental.pallas import tpu as pltpu


# ------------------------------ VMEM budgets -----------------------------------
def _vmem_budgets():
    """(sizing_budget_bytes, vmem_limit_bytes) derived from physical VMEM.

    v5e/v6e have 128 MiB VMEM per TensorCore, v7x only 64 MiB.  Tiles are sized
    against ~55% of physical and the compiler limit is set to ~75%, so the two
    stay consistent and Mosaic keeps headroom for internal scratch.
    """
    cap = 64 * 1024 * 1024  # conservative default (v7x per-TensorCore VMEM)
    try:
        info = pltpu.get_tpu_info()
        cap = int(getattr(info, "vmem_capacity_bytes", cap))
    except Exception:
        pass
    sizing = min(int(cap * 0.55), 96 * 1024 * 1024)
    limit = min(int(cap * 0.75), 112 * 1024 * 1024)
    return sizing, max(limit, sizing + 4 * 1024 * 1024)


# ------------------------------ helpers ---------------------------------------
def _prep_features(x, cast_to_bf16=False):
    """NCHW -> (M, K) row-major features (same flattening as torch .view)."""
    a, b, c, d = x.shape
    feats = x.reshape(a * b, c * d)
    if cast_to_bf16 and feats.dtype == jnp.float32:
        # Halves HBM traffic; MXU is bf16-native.  Changes numerics vs. f32.
        feats = feats.astype(jnp.bfloat16)
    return feats, a * b, c * d, 1.0 / float(a * b * c * d)


def _pick_tk(M, K, itemsize, sizing_budget):
    """Pick the K tile. Returns (tk, n_k_steps, ragged_tail)."""
    fixed = 2 * M * M * 4                      # f32 accumulator + staged f32 target
    per_col = M * itemsize                     # bytes per streamed feature column
    avail = max(sizing_budget - fixed, 2 * 128 * per_col)
    # Whole-K single block (block dim == full array dim -> no 128 alignment
    # requirement, no tail mask, one DMA per buffer) whenever it fits.
    if 2 * K * per_col <= avail:
        return K, 1, False
    # Otherwise stream K in lane-aligned tiles: multiples of 256 in [256, 2048].
    tk = (avail // (2 * per_col)) // 256 * 256
    if tk < 256:
        tk = 128                               # last-resort floor (very large M)
    tk = int(min(tk, 2048))
    n_k = int(pl.cdiv(K, tk))
    return tk, n_k, (K % tk) != 0


def _feature_spec(M, tk, n_k, itemsize, sizing_budget):
    """BlockSpec for the streamed (M, tk) feature tiles."""
    kwargs = {}
    # Deepen the pipeline when tiles are small and there are enough K steps to
    # hide per-DMA issue latency, provided a third buffer still fits the budget.
    if (tk <= 256 and n_k >= 3
            and 3 * M * tk * itemsize + 2 * M * M * 4 <= sizing_budget):
        kwargs["pipeline_mode"] = pl.Buffered(3)
    return pl.BlockSpec((M, tk), lambda k: (0, k), **kwargs)


def _masked_tile(f_ref, k, *, tk, k_total, ragged):
    """Load the (M, tk) tile; zero the out-of-bounds tail columns on the last tile."""
    f = f_ref[...]
    if ragged:  # static Python flag -> mask code only emitted when needed
        col = jax.lax.broadcasted_iota(jnp.int32, f.shape, 1) + k * tk
        f = jnp.where(col < k_total, f, jnp.zeros_like(f))
    return f


# ----------------------------- Gram matrix kernel -----------------------------
def _gram_kernel(f_ref, g_ref, *, scale, k_total, tk, ragged):
    """Accumulate F @ F^T directly into the resident output block over K tiles."""
    k = pl.program_id(0)
    f = _masked_tile(f_ref, k, tk=tk, k_total=k_total, ragged=ragged)
    part = jax.lax.dot_general(
        f, f,
        dimension_numbers=(((1,), (1,)), ((), ())),   # contract last dims (no .T)
        preferred_element_type=jnp.float32,
    )

    @pl.when(k == 0)
    def _():
        g_ref[...] = part

    @pl.when(k > 0)
    def _():
        g_ref[...] += part

    @pl.when(k == pl.num_programs(0) - 1)
    def _():
        g_ref[...] *= scale


def gram_matrix_pallas(x):
    """x: (a, b, c, d) -> (a*b, a*b) float32 gram matrix, scaled by 1/(a*b*c*d)."""
    feats, M, K, scale = _prep_features(x)
    sizing, limit = _vmem_budgets()
    itemsize = feats.dtype.itemsize
    tk, n_k, ragged = _pick_tk(M, K, itemsize, sizing)

    return pl.pallas_call(
        functools.partial(_gram_kernel, scale=scale, k_total=K, tk=tk, ragged=ragged),
        out_shape=jax.ShapeDtypeStruct((M, M), jnp.float32),
        grid_spec=pltpu.PrefetchScalarGridSpec(
            num_scalar_prefetch=0,
            grid=(n_k,),
            in_specs=[_feature_spec(M, tk, n_k, itemsize, sizing)],
            out_specs=pl.BlockSpec((M, M), lambda k: (0, 0)),
        ),
        compiler_params=pltpu.CompilerParams(
            dimension_semantics=("arbitrary",),
            vmem_limit_bytes=limit,
        ),
    )(feats)


# ------------------------- Fused gram + MSE loss kernel ------------------------
def _style_loss_kernel(f_ref, t_hbm_ref, loss_ref, acc_ref, t_vmem_ref, t_sem,
                       *, scale, inv_mm, k_total, tk, ragged):
    """Accumulate F @ F^T over K tiles; finalize with the fused MSE vs target."""
    k = pl.program_id(0)
    f = _masked_tile(f_ref, k, tk=tk, k_total=k_total, ragged=ragged)
    part = jax.lax.dot_general(
        f, f,
        dimension_numbers=(((1,), (1,)), ((), ())),
        preferred_element_type=jnp.float32,
    )

    @pl.when(k == 0)
    def _():
        # Stage the target gram HBM -> VMEM once, overlapped with the matmuls.
        pltpu.make_async_copy(t_hbm_ref, t_vmem_ref, t_sem).start()
        acc_ref[...] = part            # direct write: no zero-fill + read-add

    @pl.when(k > 0)
    def _():
        acc_ref[...] += part

    @pl.when(k == pl.num_programs(0) - 1)
    def _():
        pltpu.make_async_copy(t_hbm_ref, t_vmem_ref, t_sem).wait()
        # Scale folded into the diff pass; G never leaves VMEM.
        diff = acc_ref[...] * scale - t_vmem_ref[...]
        loss_ref[0, 0] = jnp.sum(diff * diff) * inv_mm


def style_loss_pallas(x, target_gram, cast_to_bf16=False):
    """Scalar mse(gram(x), target_gram) without materializing gram(x) in HBM."""
    feats, M, K, scale = _prep_features(x, cast_to_bf16)
    inv_mm = 1.0 / float(M * M)
    sizing, limit = _vmem_budgets()
    itemsize = feats.dtype.itemsize
    tk, n_k, ragged = _pick_tk(M, K, itemsize, sizing)

    # TODO(synk): for v7x (2 TensorCores) and M >= 256, add a "parallel" row-tile
    # grid axis over M with per-tile partial losses to use both cores.
    loss = pl.pallas_call(
        functools.partial(_style_loss_kernel, scale=scale, inv_mm=inv_mm,
                          k_total=K, tk=tk, ragged=ragged),
        out_shape=jax.ShapeDtypeStruct((1, 1), jnp.float32),
        grid_spec=pltpu.PrefetchScalarGridSpec(
            num_scalar_prefetch=0,
            grid=(n_k,),
            in_specs=[
                _feature_spec(M, tk, n_k, itemsize, sizing),  # streamed features
                pl.BlockSpec(memory_space=pl.ANY),            # target stays in HBM
            ],
            out_specs=pl.BlockSpec(memory_space=pltpu.SMEM),
            scratch_shapes=[
                pltpu.VMEM((M, M), jnp.float32),              # G accumulator
                pltpu.VMEM((M, M), jnp.float32),              # staged target gram
                pltpu.SemaphoreType.DMA(()),                  # target-copy semaphore
            ],
        ),
        compiler_params=pltpu.CompilerParams(
            dimension_semantics=("arbitrary",),
            vmem_limit_bytes=limit,
        ),
    )(feats, target_gram.astype(jnp.float32))
    return loss[0, 0]


# ------------------------------ Module wrapper ---------------------------------
class StyleLossPallas:
    """Mirrors torch StyleLoss: stores target gram at init; forward returns input
    unchanged and records self.loss = mse(gram(input), target_gram)."""

    def __init__(self, target_feature):
        self.target = gram_matrix_pallas(target_feature)  # detached by construction
        self.loss = None

    def __call__(self, x):
        self.loss = style_loss_pallas(x, self.target)
        return x


# -------------------------------- reference ------------------------------------
def _gram_ref(x):
    a, b, c, d = x.shape
    f = x.reshape(a * b, c * d).astype(jnp.float32)
    return (f @ f.T) / (a * b * c * d)


if __name__ == "__main__":
    key = jax.random.PRNGKey(0)
    k1, k2 = jax.random.split(key)

    # Small shapes consistent with the module: NCHW, batch=2, channels=4, spatial=16.
    target_feature = jax.random.normal(k1, (2, 4, 16, 16), dtype=jnp.float32)
    x = jax.random.normal(k2, (2, 4, 16, 16), dtype=jnp.float32)

    module = StyleLossPallas(target_feature)
    out = module(x)

    out = jax.block_until_ready(out)
    loss = jax.block_until_ready(module.loss)

    # Sanity check against pure-JAX reference.
    g_ref = _gram_ref(x)
    t_ref = _gram_ref(target_feature)
    loss_ref = jnp.mean((g_ref - t_ref) ** 2)

    assert out.shape == x.shape
    assert jnp.allclose(out, x)
    assert jnp.allclose(module.target, t_ref, rtol=1e-5, atol=1e-6)
    assert jnp.allclose(loss, loss_ref, rtol=1e-5, atol=1e-6), (loss, loss_ref)

    print("KERNEL_OK")
</pallas_src>

<mosaic_0001>
module attributes {stable_mosaic.version = 11 : i64} {
  func.func @_gram_kernel(%arg0: i32, %arg1: memref<8x256xf32, #tpu.memory_space<vmem>>, %arg2: memref<8x8xf32, #tpu.memory_space<vmem>>) attributes {dimension_semantics = [#tpu.dimension_semantics<arbitrary>], iteration_bounds = array<i64: 1>, scalar_prefetch = 0 : i64, scratch_operands = 0 : i64, tpu.core_type = #tpu.core_type<tc>, window_params = [{transform_indices = @transform_0, window_bounds = array<i64: 8, 256>}, {pipeline_mode = #tpu.pipeline_mode<synchronous>, transform_indices = @transform_1, window_bounds = array<i64: 8, 8>}]} {
    %c0 = arith.constant 0 : index
    %c0_0 = arith.constant 0 : index
    %0 = vector.load %arg1[%c0, %c0_0] : memref<8x256xf32, #tpu.memory_space<vmem>>, vector<8x256xf32>
    %cst = arith.constant dense<0.000000e+00> : vector<8x8xf32>
    %1 = tpu.matmul %0, %0, %cst {dimension_numbers = #tpu.dot_dimension_numbers<[1], [1], [0], [0], [0, 0, 1, 0], [], []>} : vector<8x256xf32>, vector<8x256xf32>, vector<8x8xf32> -> vector<8x8xf32>
    %c0_i32 = arith.constant 0 : i32
    %2 = arith.cmpi eq, %arg0, %c0_i32 : i32
    %3 = arith.extui %2 : i1 to i32
    %c0_i32_1 = arith.constant 0 : i32
    %4 = arith.cmpi ne, %3, %c0_i32_1 : i32
    scf.if %4 {
      %c0_6 = arith.constant 0 : index
      %c0_7 = arith.constant 0 : index
      %11 = vector.load %arg2[%c0_6, %c0_7] : memref<8x8xf32, #tpu.memory_space<vmem>>, vector<8x8xf32>
      tpu.vector_store %arg2[%c0_6, %c0_7], %1 {strides = array<i32>} : memref<8x8xf32, #tpu.memory_space<vmem>>, vector<8x8xf32>,
    } else {
    }
    %c0_i32_2 = arith.constant 0 : i32
    %5 = arith.cmpi sgt, %arg0, %c0_i32_2 : i32
    %6 = arith.extui %5 : i1 to i32
    %c0_i32_3 = arith.constant 0 : i32
    %7 = arith.cmpi ne, %6, %c0_i32_3 : i32
    scf.if %7 {
      %c0_6 = arith.constant 0 : index
      %c0_7 = arith.constant 0 : index
      %11 = vector.load %arg2[%c0_6, %c0_7] : memref<8x8xf32, #tpu.memory_space<vmem>>, vector<8x8xf32>
      %12 = arith.addf %11, %1 : vector<8x8xf32>
      %c0_8 = arith.constant 0 : index
      %c0_9 = arith.constant 0 : index
      %13 = vector.load %arg2[%c0_8, %c0_9] : memref<8x8xf32, #tpu.memory_space<vmem>>, vector<8x8xf32>
      tpu.vector_store %arg2[%c0_8, %c0_9], %12 {strides = array<i32>} : memref<8x8xf32, #tpu.memory_space<vmem>>, vector<8x8xf32>,
    } else {
    }
    %c0_i32_4 = arith.constant 0 : i32
    %8 = arith.cmpi eq, %arg0, %c0_i32_4 : i32
    %9 = arith.extui %8 : i1 to i32
    %c0_i32_5 = arith.constant 0 : i32
    %10 = arith.cmpi ne, %9, %c0_i32_5 : i32
    scf.if %10 {
      %c0_6 = arith.constant 0 : index
      %c0_7 = arith.constant 0 : index
      %11 = vector.load %arg2[%c0_6, %c0_7] : memref<8x8xf32, #tpu.memory_space<vmem>>, vector<8x8xf32>
      %cst_8 = arith.constant 4.8828125E-4 : f32
      %12 = vector.broadcast %cst_8 : f32 to vector<8x8xf32>
      %13 = arith.mulf %11, %12 : vector<8x8xf32>
      %c0_9 = arith.constant 0 : index
      %c0_10 = arith.constant 0 : index
      %14 = vector.load %arg2[%c0_9, %c0_10] : memref<8x8xf32, #tpu.memory_space<vmem>>, vector<8x8xf32>
      tpu.vector_store %arg2[%c0_9, %c0_10], %13 {strides = array<i32>} : memref<8x8xf32, #tpu.memory_space<vmem>>, vector<8x8xf32>,
    } else {
    }
    return
  }
  func.func @transform_0(%arg0: i32) -> (i32, i32) {
    %c0_i32 = arith.constant 0 : i32
    %c0_i32_0 = arith.constant 0 : i32
    return %c0_i32, %arg0 : i32, i32
  }
  func.func @transform_1(%arg0: i32) -> (i32, i32) {
    %c0_i32 = arith.constant 0 : i32
    %c0_i32_0 = arith.constant 0 : i32
    %c0_i32_1 = arith.constant 0 : i32
    return %c0_i32, %c0_i32_0 : i32, i32
  }
}

</mosaic_0001>

<llo_original>
// kernel: tpu_custom_call.1
$region0: #{tpu_custom_call.1}
  #allocation0 [shape = 'u32[]', space=smem, size = 0x4, offset = 0x4, fixed_abs, tag = 'smem constant byte address 0x4 - core index']
  #allocation1 [shape = 'u32[144,128]{1,0:T(1,128)}', space=vmem, size = 0x12000, scoped, tag = 'internal scratch']
  %s0 = inlined_call_operand.hbm [shape: f32[8,256], index: 0, kind: input, shape index: {}]
  %s1 = inlined_call_operand.hbm [shape: f32[8,8], index: 1, kind: output, shape index: {}]
  %s2 = sld [smem:[#allocation0]]
  $region30: #{tpu_custom_call.1} parent=0
    _
  %s4 = ssub.s32 1, %s2
  %s5 = scalar_select 0, %s4, %s2
  $region1: #{tpu_custom_call.1} parent=0
    #allocation2 [shape = 'u8[8192]{0}', space=vmem, size = 0x2000, scoped, tag = 'input window, operand 0, single buffered']
    #allocation3 [shape = 's32[1]{0}', space=sflag, size = 0x4, scoped, tag = 'scoped memory for tpu_custom_call.1']
    #allocation4 [shape = 's32[1]{0}', space=sflag, size = 0x4, scoped, tag = 'scoped memory for tpu_custom_call.1']
    #allocation5 [shape = 'u8[4096]{0}', space=vmem, size = 0x1000, scoped, tag = 'output window, operand 0, single buffered']
    %6 = vsyncpa [#allocation3], 0
    %7 = vsyncpa [#allocation4], 0
    // Predicated region
    $region2: #{tpu_custom_call.1} parent=1 // pred_check
      _
    $region3: #{tpu_custom_call.1} parent=1 // pred_check_branch
      %9 = sbr.rel (0) target = $region5
    $region4: #{tpu_custom_call.1} parent=1 // pred_region
      %s11 = ssub.s32 256, 256
      %12 = vsyncadd [#allocation3], %s11
      %s14 = sshll.u32 [#allocation2], 4
      %s15 = int_to_ptr.vmem [resolvable:$true] %s14
      %17 = dma.hbm_to_vmem [thread:$0]  %s0, 256, %s15, [#allocation3]
    $region5: #{tpu_custom_call.1} parent=1 // pred_fallthru
      _
    // Predicated region
    $region6: #{tpu_custom_call.1} parent=1 // pred_check
      _
    $region7: #{tpu_custom_call.1} parent=1 // pred_check_branch
      %19 = sbr.rel (0) target = $region9
    $region8: #{tpu_custom_call.1} parent=1 // pred_region
      %20 = dma.done [#allocation3], 256
    $region9: #{tpu_custom_call.1} parent=1 // pred_fallthru
      _
    %v21 = vld [vmem:[#allocation2] sm:$0xff]
    %v22 = vld [vmem:[#allocation2 + $0x8] sm:$0xff]
    %23 = vmatprep.subr.mxu0 %v22
    %24 = vmatpush1.xpose.msra.mxu0 %v21
    %25 = vmatprep.subr.mxu0 0.0
    %26 = vmatpush1.xpose.msra.mxu0 0.0
    %27 = vmatprep.subr.mxu0 0.0
    %28 = vmatpush1.xpose.msra.mxu0 0.0
    %29 = vmatprep.subr.mxu0 0.0
    %30 = vmatpush1.xpose.msra.mxu0 0.0
    %31 = vmatprep.subr.mxu0 0.0
    %32 = vmatpush1.xpose.msra.mxu0 0.0
    %33 = vmatprep.subr.mxu0 0.0
    %34 = vmatpush1.xpose.msra.mxu0 0.0
    %35 = vmatprep.subr.mxu0 0.0
    %36 = vmatpush1.xpose.msra.mxu0 0.0
    %37 = vmatprep.subr.mxu0 0.0
    %38 = vmatpush1.xpose.msra.mxu0 0.0
    %39 = vmatprep.subr.mxu0 0.0
    %40 = vmatpush1.xpose.msra.mxu0 0.0
    %41 = vmatprep.subr.mxu0 0.0
    %42 = vmatpush1.xpose.msra.mxu0 0.0
    %43 = vmatprep.subr.mxu0 0.0
    %44 = vmatpush1.xpose.msra.mxu0 0.0
    %45 = vmatprep.subr.mxu0 0.0
    %46 = vmatpush1.xpose.msra.mxu0 0.0
    %47 = vmatprep.subr.mxu0 0.0
    %48 = vmatpush1.xpose.msra.mxu0 0.0
    %49 = vmatprep.subr.mxu0 0.0
    %50 = vmatpush1.xpose.msra.mxu0 0.0
    %51 = vmatprep.subr.mxu0 0.0
    %52 = vmatpush1.xpose.msra.mxu0 0.0
    %53 = vmatprep.subr.mxu0 0.0
    %54 = vmatpush1.xpose.msra.mxu0 0.0
    %55 = vmatprep.subr.mxu0 0.0
    %56 = vmatpush1.xpose.msra.mxu0 0.0
    %57 = vmatprep.subr.mxu0 0.0
    %58 = vmatpush1.xpose.msra.mxu0 0.0
    %59 = vmatprep.subr.mxu0 0.0
    %60 = vmatpush1.xpose.msra.mxu0 0.0
    %61 = vmatprep.subr.mxu0 0.0
    %62 = vmatpush1.xpose.msra.mxu0 0.0
    %63 = vmatprep.subr.mxu0 0.0
    %64 = vmatpush1.xpose.msra.mxu0 0.0
    %65 = vmatprep.subr.mxu0 0.0
    %66 = vmatpush1.xpose.msra.mxu0 0.0
    %67 = vmatprep.subr.mxu0 0.0
    %68 = vmatpush1.xpose.msra.mxu0 0.0
    %69 = vmatprep.subr.mxu0 0.0
    %70 = vmatpush1.xpose.msra.mxu0 0.0
    %71 = vmatprep.subr.mxu0 0.0
    %72 = vmatpush1.xpose.msra.mxu0 0.0
    %73 = vmatprep.subr.mxu0 0.0
    %74 = vmatpush1.xpose.msra.mxu0 0.0
    %75 = vmatprep.subr.mxu0 0.0
    %76 = vmatpush1.xpose.msra.mxu0 0.0
    %77 = vmatprep.subr.mxu0 0.0
    %78 = vmatpush1.xpose.msra.mxu0 0.0
    %79 = vmatprep.subr.mxu0 0.0
    %80 = vmatpush1.xpose.msra.mxu0 0.0
    %81 = vmatprep.subr.mxu0 0.0
    %82 = vmatpush1.xpose.msra.mxu0 0.0
    %83 = vmatprep.subr.mxu0 0.0
    %84 = vmatpush1.xpose.msra.mxu0 0.0
    %85 = vmatprep.subr.mxu0 0.0
    %86 = vmatpush1.xpose.msra.mxu0 0.0
    %87 = vmatprep.mubr.f32.mxu0 %v22
    %88 = vmatmul.mubr.f32.gmra.mrb[0].mxu0 %v21
    %v89 = vpop.f32.mrb[0].mxu0
    %v90 = vadd.f32 0.0, %v89
    %v91 = vpop.f32.mrb[0].mxu0
    %92 = vdwg.mxu0
    %p93 = scmp.eq.s32.totalorder 0, 0
    // Predicated region
    $region10: #{tpu_custom_call.1} parent=1 // pred_check
      %p94 = pneg %p93
    $region11: #{tpu_custom_call.1} parent=1 // pred_check_branch
      %96 = sbr.rel (%p94) target = $region13
    $region12: #{tpu_custom_call.1} parent=1 // pred_region
      %vm97 = vcmask 64512
      %98 = vst.msk [vmem:[#allocation5] sm:$0xff] %vm97, %v90
    $region13: #{tpu_custom_call.1} parent=1 // pred_fallthru
      _
    %p99 = scmp.gt.s32.totalorder 0, 0
    // Predicated region
    $region14: #{tpu_custom_call.1} parent=1 // pred_check
      %p100 = pneg %p99
    $region15: #{tpu_custom_call.1} parent=1 // pred_check_branch
      %102 = sbr.rel (%p100) target = $region17
    $region16: #{tpu_custom_call.1} parent=1 // pred_region
      %v103 = vld [vmem:[#allocation5] sm:$0xff]
      %v104 = vadd.f32 %v103, %v90
      %vm105 = vcmask 64512
      %106 = vst.msk [vmem:[#allocation5] sm:$0xff] %vm105, %v104
    $region17: #{tpu_custom_call.1} parent=1 // pred_fallthru
      _
    // Predicated region
    $region18: #{tpu_custom_call.1} parent=1 // pred_check
      %p107 = pneg %p93
    $region19: #{tpu_custom_call.1} parent=1 // pred_check_branch
      %109 = sbr.rel (%p107) target = $region21
    $region20: #{tpu_custom_call.1} parent=1 // pred_region
      %v110 = vld [vmem:[#allocation5] sm:$0xff]
      %v111 = vmul.f32 %v110, 0.00048828125
      %vm112 = vcmask 64512
      %113 = vst.msk [vmem:[#allocation5] sm:$0xff] %vm112, %v111
    $region21: #{tpu_custom_call.1} parent=1 // pred_fallthru
      _
    // Predicated region
    $region22: #{tpu_custom_call.1} parent=1 // pred_check
      _
    $region23: #{tpu_custom_call.1} parent=1 // pred_check_branch
      %115 = sbr.rel (0) target = $region25
    $region24: #{tpu_custom_call.1} parent=1 // pred_region
      %s117 = ssub.s32 128, 128
      %118 = vsyncadd [#allocation4], %s117
      %s120 = sshll.u32 [#allocation5], 4
      %s121 = int_to_ptr.vmem [resolvable:$true] %s120
      %123 = dma.vmem_to_hbm [thread:$0]  %s121, 128, %s1, [#allocation4]
    $region25: #{tpu_custom_call.1} parent=1 // pred_fallthru
      _
    // Predicated region
    $region26: #{tpu_custom_call.1} parent=1 // pred_check
      _
    $region27: #{tpu_custom_call.1} parent=1 // pred_check_branch
      %125 = sbr.rel (0) target = $region29
    $region28: #{tpu_custom_call.1} parent=1 // pred_region
      %126 = dma.done [#allocation4], 128
    $region29: #{tpu_custom_call.1} parent=1 // pred_fallthru
      _
    %127 = vsyncpa [#allocation3], 1
    %128 = vsyncpa [#allocation4], 1

</llo_original>
